<compile_context>
chip_gen: v7x
topology: tpu7x:2x2x1
jax: 0.10.0
libtpu: 0.0.40
codegen_flags: <defaults>
</compile_context>

<pallas_src>
import functools

import jax
import jax.numpy as jnp
from jax import lax
from jax.experimental import pallas as pl
from jax.experimental.pallas import tpu as pltpu


def _round_up(x, m):
    return ((x + m - 1) // m) * m


def _choose_l_tiling(L, D, Kp):
    """Pick (Lp, TL): padded length + lane-dense L tile, VMEM-budget aware.

    Per-L-column f32 bytes: x/q blocks (double-buffered) ~ 4*D plus in-kernel
    (Kp, TL) temporaries (xe, dist, iota, one-hot, ...) ~ 6*Kp.  The budget is
    kept well under v7x's 64 MiB so the pipeline never collapses as K grows.
    """
    bytes_per_col = 4 * (4 * D + 6 * Kp + 8)
    budget = 24 << 20
    cap = max(128, min(2048, ((budget // bytes_per_col) // 128) * 128))
    if L < 128:
        # Single full-width (un-padded) tile; block == full dim is allowed.
        # TODO(synk): if B == 1 this yields a single grid step (one v7x TC idle).
        return L, L
    Lp = _round_up(L, 128)
    tl = 128
    for cand in (2048, 1024, 512, 256, 128):
        if cand <= cap and Lp % cand == 0:
            tl = cand
            break
    return Lp, tl


def _vq_kernel(x_ref, e_ref, et_ref, e2_ref, q_ref, idx_ref, part_ref,
               *, L, TL, Kp, need_mask):
    """One (batch, L-tile) block of the VQ forward, entirely in NCL layout.

    x_ref:    (1, D, TL)  conv1d activations (channels x positions)
    e_ref:    (Kp, D)     codebook, zero-padded to lane-dense Kp (resident)
    et_ref:   (D, Kp)     codebook transpose (resident; keeps both matmuls canonical)
    e2_ref:   (Kp, 1)     ||e_k||^2 (+1e30 sentinel for padded codes)
    q_ref:    (1, D, TL)  quantized output, already NCL (out)
    idx_ref:  (1, 1, TL)  int32 code index per position (out)
    part_ref: (8, Kp)     per-tile partials: row0 = per-code counts,
                          row1 = sum((q - x)^2) broadcast across lanes (out)
    """
    x = x_ref[0]                      # (D, TL)
    e = e_ref[...]                    # (Kp, D)
    et = et_ref[...]                  # (D, Kp)
    e2 = e2_ref[...]                  # (Kp, 1)

    # <e_k, x_l> on the MXU (canonical (Kp,D)x(D,TL)).  ||x_l||^2 is a
    # per-position constant and is dropped from the distance: it cannot change
    # the argmin (up to f32 rounding of exact ties); ||e_k||^2 is precomputed.
    xe = lax.dot_general(e, x, (((1,), (0,)), ((), ())),
                         preferred_element_type=jnp.float32)        # (Kp, TL)
    dist = e2 - 2.0 * xe                                            # (Kp, TL)

    # First-occurrence argmin over codes (matches torch.argmin tie behaviour).
    # Kept as min/compare/min in f32 for portable Mosaic lowering of the
    # cross-sublane index reduce (index values are exact in f32 for Kp < 2^24).
    mins = jnp.min(dist, axis=0, keepdims=True)                     # (1, TL)
    code_iota = lax.broadcasted_iota(jnp.int32, (Kp, TL), 0).astype(jnp.float32)
    idx_f = jnp.min(jnp.where(dist == mins, code_iota, jnp.float32(Kp)),
                    axis=0, keepdims=True)                          # (1, TL)
    enc = (code_iota == idx_f).astype(jnp.float32)                  # (Kp, TL) one-hot columns

    # Codebook gather as a canonical (D,Kp)x(Kp,TL) matmul -> already NCL layout.
    q = lax.dot_general(et, enc, (((1,), (0,)), ((), ())),
                        preferred_element_type=jnp.float32)         # (D, TL)

    q_ref[0] = q
    idx_ref[0] = idx_f.astype(jnp.int32)

    # Per-tile partial reductions (commitment-loss SSE + per-code counts); the
    # wrapper finishes the scalars, so it never re-reads x/q/encodings from HBM.
    if need_mask:
        lane = lax.broadcasted_iota(jnp.int32, (1, TL), 1)
        valid = ((pl.program_id(1) * TL + lane) < L).astype(jnp.float32)  # (1, TL)
        diff2 = (q - x) * (q - x) * valid
        enc_sum = jnp.sum(enc * valid, axis=1)                      # (Kp,)
    else:
        diff2 = (q - x) * (q - x)
        enc_sum = jnp.sum(enc, axis=1)                              # (Kp,)
    sse = jnp.sum(diff2)                                            # scalar

    rows = lax.broadcasted_iota(jnp.int32, (8, Kp), 0)
    part = jnp.where(rows == 0, enc_sum[None, :], 0.0)
    part = jnp.where(rows == 1, sse, part)
    part_ref[...] = part


def vq_forward(x_ncl, embedding, commitment_cost):
    """Forward pass of ImprovedVectorQuantizer (eval semantics).

    Args:
      x_ncl:      (B, D, L) float32 inputs, NCL (conv1d) layout.
      embedding:  (K, D) float32 codebook.
    Returns:
      (loss, quantized_ncl, perplexity, encodings) matching the torch module.
    """
    B, D, L = x_ncl.shape
    K = embedding.shape[0]
    N = B * L

    Kp = _round_up(max(K, 128), 128)          # lane-dense codebook width
    Lp, TL = _choose_l_tiling(L, D, Kp)
    nLT = Lp // TL

    x = x_ncl.astype(jnp.float32)
    if Lp != L:
        x = jnp.pad(x, ((0, 0), (0, 0), (0, Lp - L)))

    e_pad = jnp.zeros((Kp, D), jnp.float32).at[:K, :].set(embedding.astype(jnp.float32))
    e_t = e_pad.T                                                    # (D, Kp)
    e2 = jnp.sum(e_pad * e_pad, axis=1, keepdims=True)               # (Kp, 1)
    e2 = jnp.where(jnp.arange(Kp)[:, None] < K, e2, jnp.float32(1e30))

    # VMEM budget: resident codebook tensors + double-buffered blocks + temporaries.
    resident = 4 * (2 * Kp * D + Kp)
    per_step = 4 * (2 * D * TL + TL + 8 * Kp)
    temps = 4 * (6 * Kp * TL + 2 * D * TL)
    vmem_limit = int(min(max(int(1.4 * (resident + 2 * per_step + temps)), 8 << 20),
                         48 << 20))

    kernel = functools.partial(_vq_kernel, L=L, TL=TL, Kp=Kp, need_mask=(Lp != L))

    q, idx, part = pl.pallas_call(
        kernel,
        grid=(B, nLT),
        in_specs=[
            pl.BlockSpec((1, D, TL), lambda b, l: (b, 0, l)),        # x (pipelined)
            pl.BlockSpec((Kp, D), lambda b, l: (0, 0)),              # codebook (resident)
            pl.BlockSpec((D, Kp), lambda b, l: (0, 0)),              # codebook^T (resident)
            pl.BlockSpec((Kp, 1), lambda b, l: (0, 0)),              # ||e||^2 (resident)
        ],
        out_specs=(
            pl.BlockSpec((1, D, TL), lambda b, l: (b, 0, l)),        # quantized (NCL)
            pl.BlockSpec((1, 1, TL), lambda b, l: (b, 0, l)),        # code indices
            pl.BlockSpec((8, Kp), lambda b, l: (b * nLT + l, 0)),    # per-tile partials
        ),
        out_shape=(
            jax.ShapeDtypeStruct((B, D, Lp), jnp.float32),
            jax.ShapeDtypeStruct((B, 1, Lp), jnp.int32),
            jax.ShapeDtypeStruct((B * nLT * 8, Kp), jnp.float32),
        ),
        compiler_params=pltpu.CompilerParams(
            dimension_semantics=("parallel", "parallel"),
            vmem_limit_bytes=vmem_limit,
        ),
        cost_estimate=pl.CostEstimate(
            flops=4 * B * Lp * Kp * D,
            transcendentals=0,
            bytes_accessed=4 * (2 * B * D * Lp + B * Lp + B * nLT * 8 * Kp
                                + 2 * Kp * D + Kp),
        ),
    )(x, e_pad, e_t, e2)

    quantized_ncl = q[:, :, :L]                      # already NCL, no transpose needed
    indices = idx[:, 0, :L].reshape(N)               # row order matches torch's (b, l)
    # The module returns the dense one-hot encodings; rebuild them outside the
    # kernel from the indices (single cheap XLA op, only because the caller
    # consumes them).
    encodings = jax.nn.one_hot(indices, K, dtype=jnp.float32)

    part = part.reshape(B * nLT, 8, Kp)
    counts = jnp.sum(part[:, 0, :K], axis=0)         # per-code counts over valid rows
    sse = jnp.sum(part[:, 1, 0])                     # sum of (q - x)^2 over valid rows

    loss = commitment_cost * sse / (N * D)
    avg_probs = counts / N
    perplexity = jnp.exp(-jnp.sum(avg_probs * jnp.log(avg_probs + 1e-10)))

    # Straight-through estimator: forward value of inputs + (q - inputs).detach()
    # equals q; gradient routing is a backward-pass concern.
    return loss, quantized_ncl, perplexity, encodings


if __name__ == "__main__":
    # Small shapes consistent with the module: embedding_dim=32, 64 codes,
    # batch=2, sequence length=16 (NCL conv1d activations).
    B, D, L, K = 2, 32, 16, 64
    commitment_cost = 0.25

    key = jax.random.PRNGKey(0)
    k_x, k_e = jax.random.split(key)
    x = jax.random.normal(k_x, (B, D, L), dtype=jnp.float32)          # NCL inputs
    embedding = jax.random.normal(k_e, (K, D), dtype=jnp.float32)     # codebook ~ N(0,1)

    loss, quantized, perplexity, encodings = jax.block_until_ready(
        vq_forward(x, embedding, commitment_cost))

    # pure-JAX reference for a sanity check
    inputs = jnp.transpose(x, (0, 2, 1))
    flat = inputs.reshape(-1, D)
    dist = (jnp.sum(flat ** 2, axis=1, keepdims=True)
            + jnp.sum(embedding ** 2, axis=1)
            - 2.0 * flat @ embedding.T)
    idx_ref = jnp.argmin(dist, axis=1)
    enc_ref = jax.nn.one_hot(idx_ref, K, dtype=jnp.float32)
    q_ref = (enc_ref @ embedding).reshape(inputs.shape)
    loss_ref = commitment_cost * jnp.mean((q_ref - inputs) ** 2)
    avg = jnp.mean(enc_ref, axis=0)
    perp_ref = jnp.exp(-jnp.sum(avg * jnp.log(avg + 1e-10)))

    assert jnp.allclose(encodings, enc_ref), "encodings mismatch"
    assert jnp.allclose(quantized, jnp.transpose(q_ref, (0, 2, 1)),
                        atol=1e-5), "quantized mismatch"
    assert jnp.allclose(loss, loss_ref, atol=1e-5), "loss mismatch"
    assert jnp.allclose(perplexity, perp_ref, atol=1e-4), "perplexity mismatch"

    print("KERNEL_OK")
</pallas_src>

<mosaic_0001>
module attributes {stable_mosaic.version = 11 : i64} {
  func.func @_vq_kernel(%arg0: i32, %arg1: i32, %arg2: memref<1x32x16xf32, #tpu.memory_space<vmem>>, %arg3: memref<128x32xf32, #tpu.memory_space<vmem>>, %arg4: memref<32x128xf32, #tpu.memory_space<vmem>>, %arg5: memref<128x1xf32, #tpu.memory_space<vmem>>, %arg6: memref<1x32x16xf32, #tpu.memory_space<vmem>>, %arg7: memref<1x1x16xi32, #tpu.memory_space<vmem>>, %arg8: memref<8x128xf32, #tpu.memory_space<vmem>>) attributes {dimension_semantics = [#tpu.dimension_semantics<parallel>, #tpu.dimension_semantics<parallel>], iteration_bounds = array<i64: 2, 1>, scalar_prefetch = 0 : i64, scratch_operands = 0 : i64, tpu.core_type = #tpu.core_type<tc>, window_params = [{transform_indices = @transform_0, window_bounds = array<i64: 1, 32, 16>}, {pipeline_mode = #tpu.pipeline_mode<synchronous>, transform_indices = @transform_1, window_bounds = array<i64: 128, 32>}, {pipeline_mode = #tpu.pipeline_mode<synchronous>, transform_indices = @transform_2, window_bounds = array<i64: 32, 128>}, {pipeline_mode = #tpu.pipeline_mode<synchronous>, transform_indices = @transform_3, window_bounds = array<i64: 128, 1>}, {transform_indices = @transform_4, window_bounds = array<i64: 1, 32, 16>}, {transform_indices = @transform_5, window_bounds = array<i64: 1, 1, 16>}, {transform_indices = @transform_6, window_bounds = array<i64: 8, 128>}]} {
    %c0 = arith.constant 0 : index
    %c0_0 = arith.constant 0 : index
    %c0_1 = arith.constant 0 : index
    %0 = vector.load %arg2[%c0, %c0_0, %c0_1] : memref<1x32x16xf32, #tpu.memory_space<vmem>>, vector<1x32x16xf32>
    %1 = vector.shape_cast %0 : vector<1x32x16xf32> to vector<32x16xf32>
    %c0_2 = arith.constant 0 : index
    %c0_3 = arith.constant 0 : index
    %2 = vector.load %arg3[%c0_2, %c0_3] : memref<128x32xf32, #tpu.memory_space<vmem>>, vector<128x32xf32>
    %c0_4 = arith.constant 0 : index
    %c0_5 = arith.constant 0 : index
    %3 = vector.load %arg4[%c0_4, %c0_5] : memref<32x128xf32, #tpu.memory_space<vmem>>, vector<32x128xf32>
    %c0_6 = arith.constant 0 : index
    %c0_7 = arith.constant 0 : index
    %4 = vector.load %arg5[%c0_6, %c0_7] : memref<128x1xf32, #tpu.memory_space<vmem>>, vector<128x1xf32>
    %cst = arith.constant dense<0.000000e+00> : vector<128x16xf32>
    %5 = tpu.matmul %2, %1, %cst {dimension_numbers = #tpu.dot_dimension_numbers<[1], [0], [0], [1], [0, 0, 1, 1], [], []>} : vector<128x32xf32>, vector<32x16xf32>, vector<128x16xf32> -> vector<128x16xf32>
    %cst_8 = arith.constant 2.000000e+00 : f32
    %6 = vector.broadcast %cst_8 : f32 to vector<128x16xf32>
    %7 = arith.mulf %6, %5 : vector<128x16xf32>
    %8 = vector.broadcast %4 : vector<128x1xf32> to vector<128x16xf32>
    %9 = arith.subf %8, %7 : vector<128x16xf32>
    %cst_9 = arith.constant dense<0x7F800000> : vector<16xf32>
    %10 = vector.multi_reduction <minimumf>, %9, %cst_9 [0] : vector<128x16xf32> to vector<16xf32>
    %11 = vector.shape_cast %10 : vector<16xf32> to vector<1x16xf32>
    %12 = tpu.iota {dimensions = array<i32: 0>} : vector<128x16xi32>
    %13 = arith.sitofp %12 : vector<128x16xi32> to vector<128x16xf32>
    %14 = vector.broadcast %11 : vector<1x16xf32> to vector<128x16xf32>
    %15 = arith.cmpf oeq, %9, %14 : vector<128x16xf32>
    %cst_10 = arith.constant 1.280000e+02 : f32
    %16 = vector.broadcast %cst_10 : f32 to vector<128x16xf32>
    %17 = arith.select %15, %13, %16 : vector<128x16xi1>, vector<128x16xf32>
    %cst_11 = arith.constant dense<0x7F800000> : vector<16xf32>
    %18 = vector.multi_reduction <minimumf>, %17, %cst_11 [0] : vector<128x16xf32> to vector<16xf32>
    %19 = vector.shape_cast %18 : vector<16xf32> to vector<1x16xf32>
    %20 = vector.broadcast %19 : vector<1x16xf32> to vector<128x16xf32>
    %21 = arith.cmpf oeq, %13, %20 : vector<128x16xf32>
    %22 = arith.extui %21 : vector<128x16xi1> to vector<128x16xi32>
    %23 = arith.sitofp %22 : vector<128x16xi32> to vector<128x16xf32>
    %cst_12 = arith.constant dense<0.000000e+00> : vector<32x16xf32>
    %24 = tpu.matmul %3, %23, %cst_12 {dimension_numbers = #tpu.dot_dimension_numbers<[1], [0], [0], [1], [0, 0, 1, 1], [], []>} : vector<32x128xf32>, vector<128x16xf32>, vector<32x16xf32> -> vector<32x16xf32>
    %c0_13 = arith.constant 0 : index
    %c0_14 = arith.constant 0 : index
    %c0_15 = arith.constant 0 : index
    %25 = vector.load %arg6[%c0_13, %c0_14, %c0_15] : memref<1x32x16xf32, #tpu.memory_space<vmem>>, vector<1x32x16xf32>
    %26 = vector.shape_cast %25 : vector<1x32x16xf32> to vector<32x16xf32>
    %27 = vector.shape_cast %24 : vector<32x16xf32> to vector<1x32x16xf32>
    tpu.vector_store %arg6[%c0_13, %c0_14, %c0_15], %27 {strides = array<i32>} : memref<1x32x16xf32, #tpu.memory_space<vmem>>, vector<1x32x16xf32>,
    %28 = arith.fptosi %19 : vector<1x16xf32> to vector<1x16xi32>
    %c0_16 = arith.constant 0 : index
    %c0_17 = arith.constant 0 : index
    %c0_18 = arith.constant 0 : index
    %29 = vector.load %arg7[%c0_16, %c0_17, %c0_18] : memref<1x1x16xi32, #tpu.memory_space<vmem>>, vector<1x1x16xi32>
    %30 = vector.shape_cast %29 : vector<1x1x16xi32> to vector<1x16xi32>
    %31 = vector.shape_cast %28 : vector<1x16xi32> to vector<1x1x16xi32>
    tpu.vector_store %arg7[%c0_16, %c0_17, %c0_18], %31 {strides = array<i32>} : memref<1x1x16xi32, #tpu.memory_space<vmem>>, vector<1x1x16xi32>,
    %32 = arith.subf %24, %1 : vector<32x16xf32>
    %33 = arith.subf %24, %1 : vector<32x16xf32>
    %34 = arith.mulf %32, %33 : vector<32x16xf32>
    %cst_19 = arith.constant dense<0.000000e+00> : vector<128xf32>
    %35 = vector.multi_reduction <add>, %23, %cst_19 [1] : vector<128x16xf32> to vector<128xf32>
    %36 = vector.shape_cast %34 : vector<32x16xf32> to vector<1x32x16xf32>
    %cst_20 = arith.constant dense<0.000000e+00> : vector<1xf32>
    %37 = vector.multi_reduction <add>, %36, %cst_20 [1, 2] : vector<1x32x16xf32> to vector<1xf32>
    %38 = vector.shape_cast %37 : vector<1xf32> to vector<1x1x1xf32>
    %39 = vector.extract %38[0, 0, 0] : f32 from vector<1x1x1xf32>
    %40 = tpu.iota {dimensions = array<i32: 0>} : vector<8x128xi32>
    %c0_i32 = arith.constant 0 : i32
    %41 = vector.broadcast %c0_i32 : i32 to vector<8x128xi32>
    %42 = arith.cmpi eq, %40, %41 : vector<8x128xi32>
    %43 = vector.shape_cast %35 : vector<128xf32> to vector<1x128xf32>
    %cst_21 = arith.constant 0.000000e+00 : f32
    %44 = vector.shape_cast %43 : vector<1x128xf32> to vector<1x128xf32>
    %45 = vector.broadcast %44 : vector<1x128xf32> to vector<8x128xf32>
    %46 = vector.broadcast %cst_21 : f32 to vector<8x128xf32>
    %47 = arith.select %42, %45, %46 : vector<8x128xi1>, vector<8x128xf32>
    %c1_i32 = arith.constant 1 : i32
    %48 = vector.broadcast %c1_i32 : i32 to vector<8x128xi32>
    %49 = arith.cmpi eq, %40, %48 : vector<8x128xi32>
    %50 = vector.broadcast %39 : f32 to vector<8x128xf32>
    %51 = arith.select %49, %50, %47 : vector<8x128xi1>, vector<8x128xf32>
    %c0_22 = arith.constant 0 : index
    %c0_23 = arith.constant 0 : index
    %52 = vector.load %arg8[%c0_22, %c0_23] : memref<8x128xf32, #tpu.memory_space<vmem>>, vector<8x128xf32>
    tpu.vector_store %arg8[%c0_22, %c0_23], %51 {strides = array<i32>} : memref<8x128xf32, #tpu.memory_space<vmem>>, vector<8x128xf32>,
    return
  }
  func.func @transform_0(%arg0: i32, %arg1: i32) -> (i32, i32, i32) {
    %c0_i32 = arith.constant 0 : i32
    %c0_i32_0 = arith.constant 0 : i32
    return %arg0, %c0_i32, %arg1 : i32, i32, i32
  }
  func.func @transform_1(%arg0: i32, %arg1: i32) -> (i32, i32) {
    %c0_i32 = arith.constant 0 : i32
    %c0_i32_0 = arith.constant 0 : i32
    %c0_i32_1 = arith.constant 0 : i32
    return %c0_i32, %c0_i32_0 : i32, i32
  }
  func.func @transform_2(%arg0: i32, %arg1: i32) -> (i32, i32) {
    %c0_i32 = arith.constant 0 : i32
    %c0_i32_0 = arith.constant 0 : i32
    %c0_i32_1 = arith.constant 0 : i32
    return %c0_i32, %c0_i32_0 : i32, i32
  }
  func.func @transform_3(%arg0: i32, %arg1: i32) -> (i32, i32) {
    %c0_i32 = arith.constant 0 : i32
    %c0_i32_0 = arith.constant 0 : i32
    %c0_i32_1 = arith.constant 0 : i32
    return %c0_i32, %c0_i32_0 : i32, i32
  }
  func.func @transform_4(%arg0: i32, %arg1: i32) -> (i32, i32, i32) {
    %c0_i32 = arith.constant 0 : i32
    %c0_i32_0 = arith.constant 0 : i32
    return %arg0, %c0_i32, %arg1 : i32, i32, i32
  }
  func.func @transform_5(%arg0: i32, %arg1: i32) -> (i32, i32, i32) {
    %c0_i32 = arith.constant 0 : i32
    %c0_i32_0 = arith.constant 0 : i32
    return %arg0, %c0_i32, %arg1 : i32, i32, i32
  }
  func.func @transform_6(%arg0: i32, %arg1: i32) -> (i32, i32) {
    %c1_i32 = arith.constant 1 : i32
    %0 = arith.muli %arg0, %c1_i32 : i32
    %1 = arith.addi %0, %arg1 : i32
    %c0_i32 = arith.constant 0 : i32
    %c0_i32_0 = arith.constant 0 : i32
    return %1, %c0_i32 : i32, i32
  }
}

</mosaic_0001>

<llo_original>
// kernel: tpu_custom_call.1
$region0: #{tpu_custom_call.1}
  #allocation0 [shape = 'u32[]', space=smem, size = 0x4, offset = 0x4, fixed_abs, tag = 'smem constant byte address 0x4 - core index']
  #allocation1 [shape = 'u32[144,128]{1,0:T(1,128)}', space=vmem, size = 0x12000, scoped, tag = 'internal scratch']
  %s0 = inlined_call_operand.vmem [shape: f32[2,32,16], index: 0, kind: input, shape index: {}]
  %s1 = inlined_call_operand.vmem [shape: f32[128,32], index: 1, kind: input, shape index: {}]
  %s2 = inlined_call_operand.vmem [shape: f32[32,128], index: 2, kind: input, shape index: {}]
  %s3 = inlined_call_operand.vmem [shape: f32[128,1], index: 3, kind: input, shape index: {}]
  %s4 = inlined_call_operand.vmem [shape: f32[2,32,16], index: 4, kind: output, shape index: {0}]
  %s5 = inlined_call_operand.hbm [shape: s32[2,1,16], index: 5, kind: output, shape index: {1}]
  %s6 = inlined_call_operand.hbm [shape: f32[16,128], index: 6, kind: output, shape index: {2}]
  %7 = xla_tuple %s4, %s5, %s6
  %s8 = sld [smem:[#allocation0]]
  $region65: #{tpu_custom_call.1} parent=0
    _
  %s10 = ssub.s32 1, %s8
  %s11 = scalar_select 0, %s10, %s8
  $region1: #{tpu_custom_call.1} parent=0
    #allocation2 [shape = 'u8[1024]{0}', space=vmem, size = 0x400, scoped, tag = 'output window, operand 1']
    #allocation3 [shape = 's32[2]{0}', space=sflag, size = 0x8, scoped, tag = 'scoped memory for tpu_custom_call.1']
    #allocation4 [shape = 'u8[8192]{0}', space=vmem, size = 0x2000, scoped, tag = 'output window, operand 2']
    #allocation5 [shape = 's32[2]{0}', space=sflag, size = 0x8, scoped, tag = 'scoped memory for tpu_custom_call.1']
    %12 = vsyncpa [#allocation3], 0
    %s13 = scalar_lea.sflag [#allocation3], 1
    %14 = vsyncpa %s13, 0
    %15 = vsyncpa [#allocation5], 0
    %s16 = scalar_lea.sflag [#allocation5], 1
    %17 = vsyncpa %s16, 0
    loop: start=0, step=1, limit=4
    $region2: #{tpu_custom_call.1} parent=1 // loop_pre_header
      _
    $region3: #{tpu_custom_call.1} parent=1 // loop_header
      %s19 = sphi 0, %s23
      %p20 = scmp.ge.s32.totalorder %s19, 4
      %s26 = sphi 0, %s38
      %s27 = sphi 0, %s34
      %s28 = sphi 0, %s26
      %s29 = sphi 0, %s27
      %s30 = sphi 0, %s28
      %s31 = sphi 0, %s29
      %s43 = sphi 0, %s45
      %s46 = sphi 0, %s43
      %s47 = sphi 0, %s46
      %s63 = sphi 0, %s47
      %s67 = sphi 0, %s67
      %s69 = sphi 0, %s67
      %s70 = sphi 0, %s69
      %s84 = sphi 0, %s70
      %s88 = sphi 0, %s88
      %s90 = sphi 0, %s88
      %s91 = sphi 0, %s90
      %s105 = sphi 0, %s91
      %s109 = sphi 0, %s109
      %s111 = sphi 0, %s109
      %s112 = sphi 0, %s111
      %s126 = sphi 0, %s112
      %s134 = sphi 0, %s136
      %s137 = sphi 0, %s134
      %s138 = sphi 0, %s137
      %s154 = sphi 0, %s138
      %s162 = sphi 0, %s164
      %s165 = sphi 0, %s162
      %s166 = sphi 0, %s165
      %s182 = sphi 0, %s166
      %s190 = sphi 0, %s192
      %s193 = sphi 0, %s190
      %s194 = sphi 0, %s193
      %s210 = sphi 0, %s194
    $region4: #{tpu_custom_call.1} parent=1 // loop_header_branch
      %22 = sbr.rel (%p20) target = $region8
    $region5: #{tpu_custom_call.1} parent=1 // loop_body
      %s24 = ssub.s32 %s19, 1
      %s25 = ssub.s32 %s19, 2
      %s32 = sadd.s32 1, %s27
      %p33 = scmp.ge.s32.totalorder %s32, 1
      %s34 = scalar_select %p33, 0, %s32
      %s35 = sadd.s32 1, %s26
      %s36 = scalar_select %p33, %s35, %s26
      %p37 = scmp.ge.s32.totalorder %s36, 2
      %s38 = scalar_select %p37, 0, %s36
      %s39 = ssub.s32 %s26, %s38
      %s40 = ssub.s32 %s27, %s34
      %s41 = sor.u32 %s39, %s40
      %p42 = scmp.eq.s32.totalorder %s41, 0
      %s44 = sadd.s32 %s43, 1
      %s45 = scalar_select %p42, %s43, %s44
      %p48 = pneg %p42
      %p49 = scmp.eq.s32.totalorder %s19, 1
      %p50 = por %p48, %p49
      %p51 = scmp.ne.s32.totalorder %s43, %s46
      %p52 = scmp.eq.s32.totalorder %s19, 0
      %p53 = por %p51, %p52
      %p54 = scmp.ne.s32.totalorder %s43, %s46
      %p55 = scmp.eq.s32.totalorder %s24, 1
      %p56 = por %p54, %p55
      %p57 = scmp.ne.s32.totalorder %s46, %s47
      %p58 = scmp.eq.s32.totalorder %s24, 0
      %p59 = por %p57, %p58
      %p60 = scmp.ne.s32.totalorder %s46, %s47
      %p61 = scmp.eq.s32.totalorder %s25, 1
      %p62 = por %p60, %p61
      %p64 = scmp.ne.s32.totalorder %s47, %s63
      %p65 = scmp.eq.s32.totalorder %s25, 0
      %p66 = por %p64, %p65
      %s68 = sadd.s32 %s67, 1
      %p71 = scmp.eq.s32.totalorder %s19, 1
      %p72 = scmp.ne.s32.totalorder %s67, %s69
      %p73 = scmp.eq.s32.totalorder %s19, 0
      %p74 = por %p72, %p73
      %p75 = scmp.ne.s32.totalorder %s67, %s69
      %p76 = scmp.eq.s32.totalorder %s24, 1
      %p77 = por %p75, %p76
      %p78 = scmp.ne.s32.totalorder %s69, %s70
      %p79 = scmp.eq.s32.totalorder %s24, 0
      %p80 = por %p78, %p79
      %p81 = scmp.ne.s32.totalorder %s69, %s70
      %p82 = scmp.eq.s32.totalorder %s25, 1
      %p83 = por %p81, %p82
      %p85 = scmp.ne.s32.totalorder %s70, %s84
      %p86 = scmp.eq.s32.totalorder %s25, 0
      %p87 = por %p85, %p86
      %s89 = sadd.s32 %s88, 1
      %p92 = scmp.eq.s32.totalorder %s19, 1
      %p93 = scmp.ne.s32.totalorder %s88, %s90
      %p94 = scmp.eq.s32.totalorder %s19, 0
      %p95 = por %p93, %p94
      %p96 = scmp.ne.s32.totalorder %s88, %s90
      %p97 = scmp.eq.s32.totalorder %s24, 1
      %p98 = por %p96, %p97
      %p99 = scmp.ne.s32.totalorder %s90, %s91
      %p100 = scmp.eq.s32.totalorder %s24, 0
      %p101 = por %p99, %p100
      %p102 = scmp.ne.s32.totalorder %s90, %s91
      %p103 = scmp.eq.s32.totalorder %s25, 1
      %p104 = por %p102, %p103
      %p106 = scmp.ne.s32.totalorder %s91, %s105
      %p107 = scmp.eq.s32.totalorder %s25, 0
      %p108 = por %p106, %p107
      %s110 = sadd.s32 %s109, 1
      %p113 = scmp.eq.s32.totalorder %s19, 1
      %p114 = scmp.ne.s32.totalorder %s109, %s111
      %p115 = scmp.eq.s32.totalorder %s19, 0
      %p116 = por %p114, %p115
      %p117 = scmp.ne.s32.totalorder %s109, %s111
      %p118 = scmp.eq.s32.totalorder %s24, 1
      %p119 = por %p117, %p118
      %p120 = scmp.ne.s32.totalorder %s111, %s112
      %p121 = scmp.eq.s32.totalorder %s24, 0
      %p122 = por %p120, %p121
      %p123 = scmp.ne.s32.totalorder %s111, %s112
      %p124 = scmp.eq.s32.totalorder %s25, 1
      %p125 = por %p123, %p124
      %p127 = scmp.ne.s32.totalorder %s112, %s126
      %p128 = scmp.eq.s32.totalorder %s25, 0
      %p129 = por %p127, %p128
      %s130 = ssub.s32 %s26, %s38
      %s131 = ssub.s32 %s27, %s34
      %s132 = sor.u32 %s130, %s131
      %p133 = scmp.eq.s32.totalorder %s132, 0
      %s135 = sadd.s32 %s134, 1
      %s136 = scalar_select %p133, %s134, %s135
      %p139 = pneg %p133
      %p140 = scmp.eq.s32.totalorder %s19, 1
      %p141 = por %p139, %p140
      %p142 = scmp.ne.s32.totalorder %s134, %s137
      %p143 = scmp.eq.s32.totalorder %s19, 0
      %p144 = por %p142, %p143
      %p145 = scmp.ne.s32.totalorder %s134, %s137
      %p146 = scmp.eq.s32.totalorder %s24, 1
      %p147 = por %p145, %p146
      %p148 = scmp.ne.s32.totalorder %s137, %s138
      %p149 = scmp.eq.s32.totalorder %s24, 0
      %p150 = por %p148, %p149
      %p151 = scmp.ne.s32.totalorder %s137, %s138
      %p152 = scmp.eq.s32.totalorder %s25, 1
      %p153 = por %p151, %p152
      %p155 = scmp.ne.s32.totalorder %s138, %s154
      %p156 = scmp.eq.s32.totalorder %s25, 0
      %p157 = por %p155, %p156
      %s158 = ssub.s32 %s26, %s38
      %s159 = ssub.s32 %s27, %s34
      %s160 = sor.u32 %s158, %s159
      %p161 = scmp.eq.s32.totalorder %s160, 0
      %s163 = sadd.s32 %s162, 1
      %s164 = scalar_select %p161, %s162, %s163
      %p167 = pneg %p161
      %p168 = scmp.eq.s32.totalorder %s19, 1
      %p169 = por %p167, %p168
      %p170 = scmp.ne.s32.totalorder %s162, %s165
      %p171 = scmp.eq.s32.totalorder %s19, 0
      %p172 = por %p170, %p171
      %p173 = scmp.ne.s32.totalorder %s162, %s165
      %p174 = scmp.eq.s32.totalorder %s24, 1
      %p175 = por %p173, %p174
      %p176 = scmp.ne.s32.totalorder %s165, %s166
      %p177 = scmp.eq.s32.totalorder %s24, 0
      %p178 = por %p176, %p177
      %p179 = scmp.ne.s32.totalorder %s165, %s166
      %p180 = scmp.eq.s32.totalorder %s25, 1
      %p181 = por %p179, %p180
      %p183 = scmp.ne.s32.totalorder %s166, %s182
      %p184 = scmp.eq.s32.totalorder %s25, 0
      %p185 = por %p183, %p184
      %s186 = sadd.s32 %s26, %s27
      %s187 = sadd.s32 %s38, %s34
      %s188 = ssub.s32 %s186, %s187
      %p189 = scmp.eq.s32.totalorder %s188, 0
      %s191 = sadd.s32 %s190, 1
      %s192 = scalar_select %p189, %s190, %s191
      %p195 = pneg %p189
      %p196 = scmp.eq.s32.totalorder %s19, 1
      %p197 = por %p195, %p196
      %p198 = scmp.ne.s32.totalorder %s190, %s193
      %p199 = scmp.eq.s32.totalorder %s19, 0
      %p200 = por %p198, %p199
      %p201 = scmp.ne.s32.totalorder %s190, %s193
      %p202 = scmp.eq.s32.totalorder %s24, 1
      %p203 = por %p201, %p202
      %p204 = scmp.ne.s32.totalorder %s193, %s194
      %p205 = scmp.eq.s32.totalorder %s24, 0
      %p206 = por %p204, %p205
      %p207 = scmp.ne.s32.totalorder %s193, %s194
      %p208 = scmp.eq.s32.totalorder %s25, 1
      %p209 = por %p207, %p208
      %p211 = scmp.ne.s32.totalorder %s194, %s210
      %p212 = scmp.eq.s32.totalorder %s25, 0
      %p213 = por %p211, %p212
      %p214 = scmp.le.s32.totalorder 1, %s19
      %p215 = scmp.lt.s32.totalorder %s19, 3
      %p216 = pnand %p214, %p215
      %p217 = pneg %p216
      // Predicated region
      $region9: #{tpu_custom_call.1} parent=5 // pred_check
        _
      $region10: #{tpu_custom_call.1} parent=5 // pred_check_branch
        %219 = sbr.rel (%p216) target = $region12
      $region11: #{tpu_custom_call.1} parent=5 // pred_region
        %s220 = ssub.s32 %s19, 1
        // Predicated region
        $region13: #{tpu_custom_call.1} parent=11 // pred_check
          %p221 = pneg %p80
        $region14: #{tpu_custom_call.1} parent=11 // pred_check_branch
          %223 = sbr.rel (%p221) target = $region16
        $region15: #{tpu_custom_call.1} parent=11 // pred_region
          _
        $region16: #{tpu_custom_call.1} parent=11 // pred_fallthru
          _
        // Predicated region
        $region17: #{tpu_custom_call.1} parent=11 // pred_check
          %p224 = pneg %p101
        $region18: #{tpu_custom_call.1} parent=11 // pred_check_branch
          %226 = sbr.rel (%p224) target = $region20
        $region19: #{tpu_custom_call.1} parent=11 // pred_region
          _
        $region20: #{tpu_custom_call.1} parent=11 // pred_fallthru
          _
        // Predicated region
        $region21: #{tpu_custom_call.1} parent=11 // pred_check
          %p227 = pneg %p122
        $region22: #{tpu_custom_call.1} parent=11 // pred_check_branch
          %229 = sbr.rel (%p227) target = $region24
        $region23: #{tpu_custom_call.1} parent=11 // pred_region
          _
        $region24: #{tpu_custom_call.1} parent=11 // pred_fallthru
          _
      $region12: #{tpu_custom_call.1} parent=5 // pred_fallthru
        _
      %p230 = scmp.lt.s32.totalorder %s19, 2
      // Predicated region
      $region25: #{tpu_custom_call.1} parent=5 // pred_check
        %p231 = pneg %p230
      $region26: #{tpu_custom_call.1} parent=5 // pred_check_branch
        %233 = sbr.rel (%p231) target = $region28
      $region27: #{tpu_custom_call.1} parent=5 // pred_region
        // Predicated region
        $region29: #{tpu_custom_call.1} parent=27 // pred_check
          %p234 = pneg %p53
        $region30: #{tpu_custom_call.1} parent=27 // pred_check_branch
          %236 = sbr.rel (%p234) target = $region32
        $region31: #{tpu_custom_call.1} parent=27 // pred_region
          %p237 = scmp.lt.s32.totalorder %s26, 1
          %s238 = scalar_select %p237, %s26, 1
          %p239 = scmp.lt.s32.totalorder %s27, 0
          %s240 = scalar_select %p239, %s27, 0
          %s241 = smul.addr %s238, 4
          %s242 = sadd.s32 %s240, %s241
          %s243 = smul.addr %s242, 8
          %s244 = scalar_lea.vmem %s0, %s243
        $region32: #{tpu_custom_call.1} parent=27 // pred_fallthru
          _
      $region28: #{tpu_custom_call.1} parent=5 // pred_fallthru
        _
      %p245 = scmp.le.s32.totalorder 1, %s19
      %p246 = scmp.lt.s32.totalorder %s19, 3
      %p247 = pnand %p245, %p246
      %p248 = pneg %p247
      // Predicated region
      $region33: #{tpu_custom_call.1} parent=5 // pred_check
        _
      $region34: #{tpu_custom_call.1} parent=5 // pred_check_branch
        %250 = sbr.rel (%p247) target = $region36
      $region35: #{tpu_custom_call.1} parent=5 // pred_region
        %s251 = ssub.s32 %s19, 1
        %p252 = scmp.lt.s32.totalorder %s28, 1
        %s253 = scalar_select %p252, %s28, 1
        %p254 = scmp.lt.s32.totalorder %s29, 0
        %s255 = scalar_select %p254, %s29, 0
        %s256 = smul.addr %s253, 4
        %s257 = sadd.s32 %s255, %s256
        %s258 = smul.addr %s257, 8
        %s259 = scalar_lea.vmem %s0, %s258
        %p260 = pneg %p59
        %p261 = pneg %p56
        %p262 = pneg %p80
        %p263 = pneg %p77
        %p264 = pneg %p101
        %p265 = pneg %p98
        %p266 = pneg %p122
        %p267 = pneg %p119
        %p268 = pneg %p150
        %p269 = pneg %p147
        %p270 = scmp.lt.s32.totalorder %s28, 1
        %s271 = scalar_select %p270, %s28, 1
        %p272 = scmp.lt.s32.totalorder %s29, 0
        %s273 = scalar_select %p272, %s29, 0
        %s274 = smul.addr %s271, 4
        %s275 = sadd.s32 %s273, %s274
        %s276 = smul.addr %s275, 8
        %s277 = scalar_lea.vmem %s4, %s276
        %p278 = pneg %p178
        %p279 = pneg %p175
        %s280 = sand.u32 %s165, 1
        %s281 = scalar_lea.sflag [#allocation3], %s280
        %s282 = sand.u32 %s165, 1
        %s283 = scalar_lea.vmem [#allocation2], %s282
        %p284 = pneg %p206
        %p285 = pneg %p203
        %s286 = sand.u32 %s193, 1
        %s287 = scalar_lea.sflag [#allocation5], %s286
        %s288 = sand.u32 %s193, 1
        %s289 = smul.addr %s288, 8
        %s290 = scalar_lea.vmem [#allocation4], %s289
        %p291 = scmp.lt.s32.totalorder %s28, 1
        %s292 = scalar_select %p291, %s28, 1
        %p293 = scmp.lt.s32.totalorder %s29, 0
        %s294 = scalar_select %p293, %s29, 0
        %s295 = smul.addr %s292, 4
        %s296 = sadd.s32 %s294, %s295
        %s297 = smul.addr %s296, 8
        %s298 = scalar_lea.vmem %s0, %s297
        %p299 = scmp.lt.s32.totalorder %s28, 1
        %s300 = scalar_select %p299, %s28, 1
        %p301 = scmp.lt.s32.totalorder %s29, 0
        %s302 = scalar_select %p301, %s29, 0
        %s303 = smul.addr %s300, 4
        %s304 = sadd.s32 %s302, %s303
        %s305 = smul.addr %s304, 8
        %s306 = scalar_lea.vmem %s4, %s305
        %s307 = sadd.s32 %s28, %s29
        %v308 = vld [vmem:[%s298] sm:$0xff]
        %v309 = vld [vmem:[%s298 + $0x8] sm:$0xff]
        %v310 = vld [vmem:[%s298 + $0x10] sm:$0xff]
        %v311 = vld [vmem:[%s298 + $0x18] sm:$0xff]
        %v312 = vld [vmem:[%s1] sm:$0xff]
        %v313 = vld [vmem:[%s1 + $0x8] sm:$0xff]
        %v314 = vld [vmem:[%s1 + $0x10] sm:$0xff]
        %v315 = vld [vmem:[%s1 + $0x18] sm:$0xff]
        %v316 = vld [vmem:[%s1 + $0x20] sm:$0xff]
        %v317 = vld [vmem:[%s1 + $0x28] sm:$0xff]
        %v318 = vld [vmem:[%s1 + $0x30] sm:$0xff]
        %v319 = vld [vmem:[%s1 + $0x38] sm:$0xff]
        %v320 = vld [vmem:[%s1 + $0x40] sm:$0xff]
        %v321 = vld [vmem:[%s1 + $0x48] sm:$0xff]
        %v322 = vld [vmem:[%s1 + $0x50] sm:$0xff]
        %v323 = vld [vmem:[%s1 + $0x58] sm:$0xff]
        %v324 = vld [vmem:[%s1 + $0x60] sm:$0xff]
        %v325 = vld [vmem:[%s1 + $0x68] sm:$0xff]
        %v326 = vld [vmem:[%s1 + $0x70] sm:$0xff]
        %v327 = vld [vmem:[%s1 + $0x78] sm:$0xff]
        %v328 = vld [vmem:[%s2] sm:$0xff]
        %v329 = vld [vmem:[%s2 + $0x8] sm:$0xff]
        %v330 = vld [vmem:[%s2 + $0x10] sm:$0xff]
        %v331 = vld [vmem:[%s2 + $0x18] sm:$0xff]
        %v332 = vld [vmem:[%s3] sm:$0xff]
        %v333 = vld [vmem:[%s3 + $0x8] sm:$0xff]
        %v334 = vld [vmem:[%s3 + $0x10] sm:$0xff]
        %v335 = vld [vmem:[%s3 + $0x18] sm:$0xff]
        %v336 = vld [vmem:[%s3 + $0x20] sm:$0xff]
        %v337 = vld [vmem:[%s3 + $0x28] sm:$0xff]
        %v338 = vld [vmem:[%s3 + $0x30] sm:$0xff]
        %v339 = vld [vmem:[%s3 + $0x38] sm:$0xff]
        %v340 = vld [vmem:[%s3 + $0x40] sm:$0xff]
        %v341 = vld [vmem:[%s3 + $0x48] sm:$0xff]
        %v342 = vld [vmem:[%s3 + $0x50] sm:$0xff]
        %v343 = vld [vmem:[%s3 + $0x58] sm:$0xff]
        %v344 = vld [vmem:[%s3 + $0x60] sm:$0xff]
        %v345 = vld [vmem:[%s3 + $0x68] sm:$0xff]
        %v346 = vld [vmem:[%s3 + $0x70] sm:$0xff]
        %v347 = vld [vmem:[%s3 + $0x78] sm:$0xff]
        %vm348 = vcmask 261120
        %v350 = vsel %vm348, %v312, 0
        %v353 = vsel %vm348, %v313, 0
        %v356 = vsel %vm348, %v314, 0
        %v359 = vsel %vm348, %v315, 0
        %v362 = vsel %vm348, %v316, 0
        %v365 = vsel %vm348, %v317, 0
        %v368 = vsel %vm348, %v318, 0
        %v371 = vsel %vm348, %v319, 0
        %v374 = vsel %vm348, %v320, 0
        %v377 = vsel %vm348, %v321, 0
        %v380 = vsel %vm348, %v322, 0
        %v383 = vsel %vm348, %v323, 0
        %v386 = vsel %vm348, %v324, 0
        %v389 = vsel %vm348, %v325, 0
        %v392 = vsel %vm348, %v326, 0
        %v395 = vsel %vm348, %v327, 0
        %397 = vmatprep.subr.mxu0 0.0
        %398 = vmatpush1.msra.mxu0 %v308
        %399 = vmatprep.subr.mxu0 0.0
        %400 = vmatpush1.msra.mxu0 %v309
        %401 = vmatprep.subr.mxu0 0.0
        %402 = vmatpush1.msra.mxu0 %v310
        %403 = vmatprep.subr.mxu0 0.0
        %404 = vmatpush1.msra.mxu0 %v311
        %405 = vmatprep.subr.mxu0 0.0
        %406 = vmatpush1.msra.mxu0 0.0
        %407 = vmatprep.subr.mxu0 0.0
        %408 = vmatpush1.msra.mxu0 0.0
        %409 = vmatprep.subr.mxu0 0.0
        %410 = vmatpush1.msra.mxu0 0.0
        %411 = vmatprep.subr.mxu0 0.0
        %412 = vmatpush1.msra.mxu0 0.0
        %413 = vmatprep.subr.mxu0 0.0
        %414 = vmatpush1.msra.mxu0 0.0
        %415 = vmatprep.subr.mxu0 0.0
        %416 = vmatpush1.msra.mxu0 0.0
        %417 = vmatprep.subr.mxu0 0.0
        %418 = vmatpush1.msra.mxu0 0.0
        %419 = vmatprep.subr.mxu0 0.0
        %420 = vmatpush1.msra.mxu0 0.0
        %421 = vmatprep.subr.mxu0 0.0
        %422 = vmatpush1.msra.mxu0 0.0
        %423 = vmatprep.subr.mxu0 0.0
        %424 = vmatpush1.msra.mxu0 0.0
        %425 = vmatprep.subr.mxu0 0.0
        %426 = vmatpush1.msra.mxu0 0.0
        %427 = vmatprep.subr.mxu0 0.0
        %428 = vmatpush1.msra.mxu0 0.0
        %429 = vmatprep.subr.mxu0 0.0
        %430 = vmatpush1.msra.mxu0 0.0
        %431 = vmatprep.subr.mxu0 0.0
        %432 = vmatpush1.msra.mxu0 0.0
        %433 = vmatprep.subr.mxu0 0.0
        %434 = vmatpush1.msra.mxu0 0.0
        %435 = vmatprep.subr.mxu0 0.0
        %436 = vmatpush1.msra.mxu0 0.0
        %437 = vmatprep.subr.mxu0 0.0
        %438 = vmatpush1.msra.mxu0 0.0
        %439 = vmatprep.subr.mxu0 0.0
        %440 = vmatpush1.msra.mxu0 0.0
        %441 = vmatprep.subr.mxu0 0.0
        %442 = vmatpush1.msra.mxu0 0.0
        %443 = vmatprep.subr.mxu0 0.0
        %444 = vmatpush1.msra.mxu0 0.0
        %445 = vmatprep.subr.mxu0 0.0
        %446 = vmatpush1.msra.mxu0 0.0
        %447 = vmatprep.subr.mxu0 0.0
        %448 = vmatpush1.msra.mxu0 0.0
        %449 = vmatprep.subr.mxu0 0.0
        %450 = vmatpush1.msra.mxu0 0.0
        %451 = vmatprep.subr.mxu0 0.0
        %452 = vmatpush1.msra.mxu0 0.0
        %453 = vmatprep.subr.mxu0 0.0
        %454 = vmatpush1.msra.mxu0 0.0
        %455 = vmatprep.subr.mxu0 0.0
        %456 = vmatpush1.msra.mxu0 0.0
        %457 = vmatprep.subr.mxu0 0.0
        %458 = vmatpush1.msra.mxu0 0.0
        %459 = vmatprep.subr.mxu0 0.0
        %460 = vmatpush1.msra.mxu0 0.0
        %461 = vmatprep.mubr.f32.mxu0 0.0
        %462 = vmatmul.mubr.f32.gmra.mrb[0].mxu0 %v350
        %v463 = vpop.f32.mrb[0].mxu0
        %v464 = vadd.f32 0.0, %v463
        %v465 = vpop.f32.mrb[0].mxu0
        %466 = vmatprep.mubr.f32.mxu0 0.0
        %467 = vmatmul.mubr.f32.gmra.mrb[0].mxu0 %v353
        %v468 = vpop.f32.mrb[0].mxu0
        %v469 = vadd.f32 0.0, %v468
        %v470 = vpop.f32.mrb[0].mxu0
        %471 = vmatprep.mubr.f32.mxu0 0.0
        %472 = vmatmul.mubr.f32.gmra.mrb[0].mxu0 %v356
        %v473 = vpop.f32.mrb[0].mxu0
        %v474 = vadd.f32 0.0, %v473
        %v475 = vpop.f32.mrb[0].mxu0
        %476 = vmatprep.mubr.f32.mxu0 0.0
        %477 = vmatmul.mubr.f32.gmra.mrb[0].mxu0 %v359
        %v478 = vpop.f32.mrb[0].mxu0
        %v479 = vadd.f32 0.0, %v478
        %v480 = vpop.f32.mrb[0].mxu0
        %481 = vmatprep.mubr.f32.mxu0 0.0
        %482 = vmatmul.mubr.f32.gmra.mrb[0].mxu0 %v362
        %v483 = vpop.f32.mrb[0].mxu0
        %v484 = vadd.f32 0.0, %v483
        %v485 = vpop.f32.mrb[0].mxu0
        %486 = vmatprep.mubr.f32.mxu0 0.0
        %487 = vmatmul.mubr.f32.gmra.mrb[0].mxu0 %v365
        %v488 = vpop.f32.mrb[0].mxu0
        %v489 = vadd.f32 0.0, %v488
        %v490 = vpop.f32.mrb[0].mxu0
        %491 = vmatprep.mubr.f32.mxu0 0.0
        %492 = vmatmul.mubr.f32.gmra.mrb[0].mxu0 %v368
        %v493 = vpop.f32.mrb[0].mxu0
        %v494 = vadd.f32 0.0, %v493
        %v495 = vpop.f32.mrb[0].mxu0
        %496 = vmatprep.mubr.f32.mxu0 0.0
        %497 = vmatmul.mubr.f32.gmra.mrb[0].mxu0 %v371
        %v498 = vpop.f32.mrb[0].mxu0
        %v499 = vadd.f32 0.0, %v498
        %v500 = vpop.f32.mrb[0].mxu0
        %501 = vmatprep.mubr.f32.mxu0 0.0
        %502 = vmatmul.mubr.f32.gmra.mrb[0].mxu0 %v374
        %v503 = vpop.f32.mrb[0].mxu0
        %v504 = vadd.f32 0.0, %v503
        %v505 = vpop.f32.mrb[0].mxu0
        %506 = vmatprep.mubr.f32.mxu0 0.0
        %507 = vmatmul.mubr.f32.gmra.mrb[0].mxu0 %v377
        %v508 = vpop.f32.mrb[0].mxu0
        %v509 = vadd.f32 0.0, %v508
        %v510 = vpop.f32.mrb[0].mxu0
        %511 = vmatprep.mubr.f32.mxu0 0.0
        %512 = vmatmul.mubr.f32.gmra.mrb[0].mxu0 %v380
        %v513 = vpop.f32.mrb[0].mxu0
        %v514 = vadd.f32 0.0, %v513
        %v515 = vpop.f32.mrb[0].mxu0
        %516 = vmatprep.mubr.f32.mxu0 0.0
        %517 = vmatmul.mubr.f32.gmra.mrb[0].mxu0 %v383
        %v518 = vpop.f32.mrb[0].mxu0
        %v519 = vadd.f32 0.0, %v518
        %v520 = vpop.f32.mrb[0].mxu0
        %521 = vmatprep.mubr.f32.mxu0 0.0
        %522 = vmatmul.mubr.f32.gmra.mrb[0].mxu0 %v386
        %v523 = vpop.f32.mrb[0].mxu0
        %v524 = vadd.f32 0.0, %v523
        %v525 = vpop.f32.mrb[0].mxu0
        %526 = vmatprep.mubr.f32.mxu0 0.0
        %527 = vmatmul.mubr.f32.gmra.mrb[0].mxu0 %v389
        %v528 = vpop.f32.mrb[0].mxu0
        %v529 = vadd.f32 0.0, %v528
        %v530 = vpop.f32.mrb[0].mxu0
        %531 = vmatprep.mubr.f32.mxu0 0.0
        %532 = vmatmul.mubr.f32.gmra.mrb[0].mxu0 %v392
        %v533 = vpop.f32.mrb[0].mxu0
        %v534 = vadd.f32 0.0, %v533
        %v535 = vpop.f32.mrb[0].mxu0
        %536 = vmatprep.mubr.f32.mxu0 0.0
        %537 = vmatmul.mubr.f32.gmra.mrb[0].mxu0 %v395
        %v538 = vpop.f32.mrb[0].mxu0
        %v539 = vadd.f32 0.0, %v538
        %v540 = vpop.f32.mrb[0].mxu0
        %541 = vdwg.mxu0
        %v542 = vmul.f32 %v464, 2.0
        %v543 = vmul.f32 %v469, 2.0
        %v544 = vmul.f32 %v474, 2.0
        %v545 = vmul.f32 %v479, 2.0
        %v546 = vmul.f32 %v484, 2.0
        %v547 = vmul.f32 %v489, 2.0
        %v548 = vmul.f32 %v494, 2.0
        %v549 = vmul.f32 %v499, 2.0
        %v550 = vmul.f32 %v504, 2.0
        %v551 = vmul.f32 %v509, 2.0
        %v552 = vmul.f32 %v514, 2.0
        %v553 = vmul.f32 %v519, 2.0
        %v554 = vmul.f32 %v524, 2.0
        %v555 = vmul.f32 %v529, 2.0
        %v556 = vmul.f32 %v534, 2.0
        %v557 = vmul.f32 %v539, 2.0
        %559 = vset.pattern.permute.xlu0 0
        %560 = vperm.xlu0 %559, %v332
        %v561 = vpop.permute.xlu0 %560
        %564 = vset.pattern.permute.xlu0 0
        %565 = vperm.xlu0 %564, %v333
        %v566 = vpop.permute.xlu0 %565
        %569 = vset.pattern.permute.xlu0 0
        %570 = vperm.xlu0 %569, %v334
        %v571 = vpop.permute.xlu0 %570
        %574 = vset.pattern.permute.xlu0 0
        %575 = vperm.xlu0 %574, %v335
        %v576 = vpop.permute.xlu0 %575
        %579 = vset.pattern.permute.xlu0 0
        %580 = vperm.xlu0 %579, %v336
        %v581 = vpop.permute.xlu0 %580
        %584 = vset.pattern.permute.xlu0 0
        %585 = vperm.xlu0 %584, %v337
        %v586 = vpop.permute.xlu0 %585
        %589 = vset.pattern.permute.xlu0 0
        %590 = vperm.xlu0 %589, %v338
        %v591 = vpop.permute.xlu0 %590
        %594 = vset.pattern.permute.xlu0 0
        %595 = vperm.xlu0 %594, %v339
        %v596 = vpop.permute.xlu0 %595
        %599 = vset.pattern.permute.xlu0 0
        %600 = vperm.xlu0 %599, %v340
        %v601 = vpop.permute.xlu0 %600
        %604 = vset.pattern.permute.xlu0 0
        %605 = vperm.xlu0 %604, %v341
        %v606 = vpop.permute.xlu0 %605
        %609 = vset.pattern.permute.xlu0 0
        %610 = vperm.xlu0 %609, %v342
        %v611 = vpop.permute.xlu0 %610
        %614 = vset.pattern.permute.xlu0 0
        %615 = vperm.xlu0 %614, %v343
        %v616 = vpop.permute.xlu0 %615
        %619 = vset.pattern.permute.xlu0 0
        %620 = vperm.xlu0 %619, %v344
        %v621 = vpop.permute.xlu0 %620
        %624 = vset.pattern.permute.xlu0 0
        %625 = vperm.xlu0 %624, %v345
        %v626 = vpop.permute.xlu0 %625
        %629 = vset.pattern.permute.xlu0 0
        %630 = vperm.xlu0 %629, %v346
        %v631 = vpop.permute.xlu0 %630
        %634 = vset.pattern.permute.xlu0 0
        %635 = vperm.xlu0 %634, %v347
        %v636 = vpop.permute.xlu0 %635
        %v638 = vsub.f32 %v561, %v542
        %v639 = vsub.f32 %v566, %v543
        %v640 = vsub.f32 %v571, %v544
        %v641 = vsub.f32 %v576, %v545
        %v642 = vsub.f32 %v581, %v546
        %v643 = vsub.f32 %v586, %v547
        %v644 = vsub.f32 %v591, %v548
        %v645 = vsub.f32 %v596, %v549
        %v646 = vsub.f32 %v601, %v550
        %v647 = vsub.f32 %v606, %v551
        %v648 = vsub.f32 %v611, %v552
        %v649 = vsub.f32 %v616, %v553
        %v650 = vsub.f32 %v621, %v554
        %v651 = vsub.f32 %v626, %v555
        %v652 = vsub.f32 %v631, %v556
        %v653 = vsub.f32 %v636, %v557
        %vm654 = vcmask 130048
        %v655 = vsel %vm654, %v638, inf
        %v656 = vsel %vm654, %v639, inf
        %v657 = vsel %vm654, %v640, inf
        %v658 = vsel %vm654, %v641, inf
        %v659 = vsel %vm654, %v642, inf
        %v660 = vmin.f32 %v655, %v659
        %v661 = vsel %vm654, %v643, inf
        %v662 = vmin.f32 %v656, %v661
        %v663 = vsel %vm654, %v644, inf
        %v664 = vmin.f32 %v657, %v663
        %v665 = vsel %vm654, %v645, inf
        %v666 = vmin.f32 %v658, %v665
        %v667 = vsel %vm654, %v646, inf
        %v668 = vmin.f32 %v660, %v667
        %v669 = vsel %vm654, %v647, inf
        %v670 = vmin.f32 %v662, %v669
        %v671 = vsel %vm654, %v648, inf
        %v672 = vmin.f32 %v664, %v671
        %v673 = vsel %vm654, %v649, inf
        %v674 = vmin.f32 %v666, %v673
        %v675 = vsel %vm654, %v650, inf
        %v676 = vmin.f32 %v668, %v675
        %v677 = vsel %vm654, %v651, inf
        %v678 = vmin.f32 %v670, %v677
        %v679 = vsel %vm654, %v652, inf
        %v680 = vmin.f32 %v672, %v679
        %v681 = vsel %vm654, %v653, inf
        %v682 = vmin.f32 %v674, %v681
        %v683 = vmin.f32 %v676, %v678
        %v684 = vmin.f32 %v680, %v682
        %v685 = vmin.f32 %v683, %v684
        %v686 = vrot.slane %v685, 4
        %v687 = vmin.f32 %v685, %v686
        %v688 = vrot.slane %v687, 2
        %v689 = vmin.f32 %v687, %v688
        %v690 = vrot.slane %v689, 1
        %v691 = vmin.f32 %v689, %v690
        %v692 = vlaneseq
        %v693 = vshrl.u32 %v692, 7
        %v694 = vadd.s32 %v693, 8
        %v695 = vadd.s32 %v693, 16
        %v696 = vadd.s32 %v693, 24
        %v697 = vadd.s32 %v693, 32
        %v698 = vadd.s32 %v693, 40
        %v699 = vadd.s32 %v693, 48
        %v700 = vadd.s32 %v693, 56
        %v701 = vadd.s32 %v693, 64
        %v702 = vadd.s32 %v693, 72
        %v703 = vadd.s32 %v693, 80
        %v704 = vadd.s32 %v693, 88
        %v705 = vadd.s32 %v693, 96
        %v706 = vadd.s32 %v693, 104
        %v707 = vadd.s32 %v693, 112
        %v708 = vadd.s32 %v693, 120
        %v709 = vcvt.s32.f32 %v693
        %v710 = vcvt.s32.f32 %v694
        %v711 = vcvt.s32.f32 %v695
        %v712 = vcvt.s32.f32 %v696
        %v713 = vcvt.s32.f32 %v697
        %v714 = vcvt.s32.f32 %v698
        %v715 = vcvt.s32.f32 %v699
        %v716 = vcvt.s32.f32 %v700
        %v717 = vcvt.s32.f32 %v701
        %v718 = vcvt.s32.f32 %v702
        %v719 = vcvt.s32.f32 %v703
        %v720 = vcvt.s32.f32 %v704
        %v721 = vcvt.s32.f32 %v705
        %v722 = vcvt.s32.f32 %v706
        %v723 = vcvt.s32.f32 %v707
        %v724 = vcvt.s32.f32 %v708
        %vm725 = vcmp.eq.f32.partialorder %v638, %v691
        %vm726 = vcmp.eq.f32.partialorder %v639, %v691
        %vm727 = vcmp.eq.f32.partialorder %v640, %v691
        %vm728 = vcmp.eq.f32.partialorder %v641, %v691
        %vm729 = vcmp.eq.f32.partialorder %v642, %v691
        %vm730 = vcmp.eq.f32.partialorder %v643, %v691
        %vm731 = vcmp.eq.f32.partialorder %v644, %v691
        %vm732 = vcmp.eq.f32.partialorder %v645, %v691
        %vm733 = vcmp.eq.f32.partialorder %v646, %v691
        %vm734 = vcmp.eq.f32.partialorder %v647, %v691
        %vm735 = vcmp.eq.f32.partialorder %v648, %v691
        %vm736 = vcmp.eq.f32.partialorder %v649, %v691
        %vm737 = vcmp.eq.f32.partialorder %v650, %v691
        %vm738 = vcmp.eq.f32.partialorder %v651, %v691
        %vm739 = vcmp.eq.f32.partialorder %v652, %v691
        %vm740 = vcmp.eq.f32.partialorder %v653, %v691
        %v741 = vsel %vm725, %v709, 128.0
        %v742 = vsel %vm726, %v710, 128.0
        %v743 = vsel %vm727, %v711, 128.0
        %v744 = vsel %vm728, %v712, 128.0
        %v745 = vsel %vm729, %v713, 128.0
        %v746 = vsel %vm730, %v714, 128.0
        %v747 = vsel %vm731, %v715, 128.0
        %v748 = vsel %vm732, %v716, 128.0
        %v749 = vsel %vm733, %v717, 128.0
        %v750 = vsel %vm734, %v718, 128.0
        %v751 = vsel %vm735, %v719, 128.0
        %v752 = vsel %vm736, %v720, 128.0
        %v753 = vsel %vm737, %v721, 128.0
        %v754 = vsel %vm738, %v722, 128.0
        %v755 = vsel %vm739, %v723, 128.0
        %v756 = vsel %vm740, %v724, 128.0
        %v757 = vsel %vm654, %v741, inf
        %v758 = vsel %vm654, %v742, inf
        %v759 = vsel %vm654, %v743, inf
        %v760 = vsel %vm654, %v744, inf
        %v761 = vsel %vm654, %v745, inf
        %v762 = vmin.f32 %v757, %v761
        %v763 = vsel %vm654, %v746, inf
        %v764 = vmin.f32 %v758, %v763
        %v765 = vsel %vm654, %v747, inf
        %v766 = vmin.f32 %v759, %v765
        %v767 = vsel %vm654, %v748, inf
        %v768 = vmin.f32 %v760, %v767
        %v769 = vsel %vm654, %v749, inf
        %v770 = vmin.f32 %v762, %v769
        %v771 = vsel %vm654, %v750, inf
        %v772 = vmin.f32 %v764, %v771
        %v773 = vsel %vm654, %v751, inf
        %v774 = vmin.f32 %v766, %v773
        %v775 = vsel %vm654, %v752, inf
        %v776 = vmin.f32 %v768, %v775
        %v777 = vsel %vm654, %v753, inf
        %v778 = vmin.f32 %v770, %v777
        %v779 = vsel %vm654, %v754, inf
        %v780 = vmin.f32 %v772, %v779
        %v781 = vsel %vm654, %v755, inf
        %v782 = vmin.f32 %v774, %v781
        %v783 = vsel %vm654, %v756, inf
        %v784 = vmin.f32 %v776, %v783
        %v785 = vmin.f32 %v778, %v780
        %v786 = vmin.f32 %v782, %v784
        %v787 = vmin.f32 %v785, %v786
        %v788 = vrot.slane %v787, 4
        %v789 = vmin.f32 %v787, %v788
        %v790 = vrot.slane %v789, 2
        %v791 = vmin.f32 %v789, %v790
        %v792 = vrot.slane %v791, 1
        %v793 = vmin.f32 %v791, %v792
        %vm794 = vcmp.eq.f32.partialorder %v709, %v793
        %vm795 = vcmp.eq.f32.partialorder %v710, %v793
        %vm796 = vcmp.eq.f32.partialorder %v711, %v793
        %vm797 = vcmp.eq.f32.partialorder %v712, %v793
        %vm798 = vcmp.eq.f32.partialorder %v713, %v793
        %vm799 = vcmp.eq.f32.partialorder %v714, %v793
        %vm800 = vcmp.eq.f32.partialorder %v715, %v793
        %vm801 = vcmp.eq.f32.partialorder %v716, %v793
        %vm802 = vcmp.eq.f32.partialorder %v717, %v793
        %vm803 = vcmp.eq.f32.partialorder %v718, %v793
        %vm804 = vcmp.eq.f32.partialorder %v719, %v793
        %vm805 = vcmp.eq.f32.partialorder %v720, %v793
        %vm806 = vcmp.eq.f32.partialorder %v721, %v793
        %vm807 = vcmp.eq.f32.partialorder %v722, %v793
        %vm808 = vcmp.eq.f32.partialorder %v723, %v793
        %vm809 = vcmp.eq.f32.partialorder %v724, %v793
        %v810 = vsel %vm794, 1, 0
        %v811 = vsel %vm795, 1, 0
        %v812 = vsel %vm796, 1, 0
        %v813 = vsel %vm797, 1, 0
        %v814 = vsel %vm798, 1, 0
        %v815 = vsel %vm799, 1, 0
        %v816 = vsel %vm800, 1, 0
        %v817 = vsel %vm801, 1, 0
        %v818 = vsel %vm802, 1, 0
        %v819 = vsel %vm803, 1, 0
        %v820 = vsel %vm804, 1, 0
        %v821 = vsel %vm805, 1, 0
        %v822 = vsel %vm806, 1, 0
        %v823 = vsel %vm807, 1, 0
        %v824 = vsel %vm808, 1, 0
        %v825 = vsel %vm809, 1, 0
        %v826 = vcvt.s32.f32 %v810
        %v827 = vcvt.s32.f32 %v811
        %v828 = vcvt.s32.f32 %v812
        %v829 = vcvt.s32.f32 %v813
        %v830 = vcvt.s32.f32 %v814
        %v831 = vcvt.s32.f32 %v815
        %v832 = vcvt.s32.f32 %v816
        %v833 = vcvt.s32.f32 %v817
        %v834 = vcvt.s32.f32 %v818
        %v835 = vcvt.s32.f32 %v819
        %v836 = vcvt.s32.f32 %v820
        %v837 = vcvt.s32.f32 %v821
        %v838 = vcvt.s32.f32 %v822
        %v839 = vcvt.s32.f32 %v823
        %v840 = vcvt.s32.f32 %v824
        %v841 = vcvt.s32.f32 %v825
        %842 = vmatprep.subr.mxu0 0.0
        %843 = vmatpush1.msra.mxu0 %v826
        %844 = vmatprep.subr.mxu0 0.0
        %845 = vmatpush1.msra.mxu0 %v827
        %846 = vmatprep.subr.mxu0 0.0
        %847 = vmatpush1.msra.mxu0 %v828
        %848 = vmatprep.subr.mxu0 0.0
        %849 = vmatpush1.msra.mxu0 %v829
        %850 = vmatprep.subr.mxu0 0.0
        %851 = vmatpush1.msra.mxu0 %v830
        %852 = vmatprep.subr.mxu0 0.0
        %853 = vmatpush1.msra.mxu0 %v831
        %854 = vmatprep.subr.mxu0 0.0
        %855 = vmatpush1.msra.mxu0 %v832
        %856 = vmatprep.subr.mxu0 0.0
        %857 = vmatpush1.msra.mxu0 %v833
        %858 = vmatprep.subr.mxu0 0.0
        %859 = vmatpush1.msra.mxu0 %v834
        %860 = vmatprep.subr.mxu0 0.0
        %861 = vmatpush1.msra.mxu0 %v835
        %862 = vmatprep.subr.mxu0 0.0
        %863 = vmatpush1.msra.mxu0 %v836
        %864 = vmatprep.subr.mxu0 0.0
        %865 = vmatpush1.msra.mxu0 %v837
        %866 = vmatprep.subr.mxu0 0.0
        %867 = vmatpush1.msra.mxu0 %v838
        %868 = vmatprep.subr.mxu0 0.0
        %869 = vmatpush1.msra.mxu0 %v839
        %870 = vmatprep.subr.mxu0 0.0
        %871 = vmatpush1.msra.mxu0 %v840
        %872 = vmatprep.subr.mxu0 0.0
        %873 = vmatpush1.msra.mxu0 %v841
        %874 = vmatprep.subr.mxu0 0.0
        %875 = vmatpush1.msra.mxu0 0.0
        %876 = vmatprep.subr.mxu0 0.0
        %877 = vmatpush1.msra.mxu0 0.0
        %878 = vmatprep.subr.mxu0 0.0
        %879 = vmatpush1.msra.mxu0 0.0
        %880 = vmatprep.subr.mxu0 0.0
        %881 = vmatpush1.msra.mxu0 0.0
        %882 = vmatprep.subr.mxu0 0.0
        %883 = vmatpush1.msra.mxu0 0.0
        %884 = vmatprep.subr.mxu0 0.0
        %885 = vmatpush1.msra.mxu0 0.0
        %886 = vmatprep.subr.mxu0 0.0
        %887 = vmatpush1.msra.mxu0 0.0
        %888 = vmatprep.subr.mxu0 0.0
        %889 = vmatpush1.msra.mxu0 0.0
        %890 = vmatprep.subr.mxu0 0.0
        %891 = vmatpush1.msra.mxu0 0.0
        %892 = vmatprep.subr.mxu0 0.0
        %893 = vmatpush1.msra.mxu0 0.0
        %894 = vmatprep.subr.mxu0 0.0
        %895 = vmatpush1.msra.mxu0 0.0
        %896 = vmatprep.subr.mxu0 0.0
        %897 = vmatpush1.msra.mxu0 0.0
        %898 = vmatprep.subr.mxu0 0.0
        %899 = vmatpush1.msra.mxu0 0.0
        %900 = vmatprep.subr.mxu0 0.0
        %901 = vmatpush1.msra.mxu0 0.0
        %902 = vmatprep.subr.mxu0 0.0
        %903 = vmatpush1.msra.mxu0 0.0
        %904 = vmatprep.subr.mxu0 0.0
        %905 = vmatpush1.msra.mxu0 0.0
        %906 = vmatprep.mubr.f32.mxu0 0.0
        %907 = vmatmul.mubr.f32.gmra.mrb[0].mxu0 %v328
        %v908 = vpop.f32.mrb[0].mxu0
        %v909 = vadd.f32 0.0, %v908
        %v910 = vpop.f32.mrb[0].mxu0
        %911 = vmatprep.mubr.f32.mxu0 0.0
        %912 = vmatmul.mubr.f32.gmra.mrb[0].mxu0 %v329
        %v913 = vpop.f32.mrb[0].mxu0
        %v914 = vadd.f32 0.0, %v913
        %v915 = vpop.f32.mrb[0].mxu0
        %916 = vmatprep.mubr.f32.mxu0 0.0
        %917 = vmatmul.mubr.f32.gmra.mrb[0].mxu0 %v330
        %v918 = vpop.f32.mrb[0].mxu0
        %v919 = vadd.f32 0.0, %v918
        %v920 = vpop.f32.mrb[0].mxu0
        %921 = vmatprep.mubr.f32.mxu0 0.0
        %922 = vmatmul.mubr.f32.gmra.mrb[0].mxu0 %v331
        %v923 = vpop.f32.mrb[0].mxu0
        %v924 = vadd.f32 0.0, %v923
        %v925 = vpop.f32.mrb[0].mxu0
        %926 = vdwg.mxu0
        %927 = vst.msk [vmem:[%s306] sm:$0xff] %vm654, %v909
        %928 = vst.msk [vmem:[%s306 + $0x8] sm:$0xff] %vm654, %v914
        %929 = vst.msk [vmem:[%s306 + $0x10] sm:$0xff] %vm654, %v919
        %930 = vst.msk [vmem:[%s306 + $0x18] sm:$0xff] %vm654, %v924
        %v931 = vcvt.f32.s32.to.zero.pseudo %v793
        %vm932 = vcmask 122880
        %933 = vst.msk [vmem:[%s283] sm:$0x1] %vm932, %v931
        %v934 = vsub.f32 %v909, %v308
        %v935 = vsub.f32 %v914, %v309
        %v936 = vsub.f32 %v919, %v310
        %v937 = vsub.f32 %v924, %v311
        %v938 = vmul.f32 %v934, %v934
        %v939 = vmul.f32 %v935, %v935
        %v940 = vmul.f32 %v936, %v936
        %v941 = vmul.f32 %v937, %v937
        %v942 = vsel %vm654, %v826, 0.0
        %943 = vadd.xlane.f32.xlu0 %v942
        %v944 = vpop.xlane.xlu0 %943
        %v945 = vsel %vm654, %v827, 0.0
        %946 = vadd.xlane.f32.xlu0 %v945
        %v947 = vpop.xlane.xlu0 %946
        %v948 = vsel %vm654, %v828, 0.0
        %949 = vadd.xlane.f32.xlu0 %v948
        %v950 = vpop.xlane.xlu0 %949
        %v951 = vsel %vm654, %v829, 0.0
        %952 = vadd.xlane.f32.xlu0 %v951
        %v953 = vpop.xlane.xlu0 %952
        %v954 = vsel %vm654, %v830, 0.0
        %955 = vadd.xlane.f32.xlu0 %v954
        %v956 = vpop.xlane.xlu0 %955
        %v957 = vsel %vm654, %v831, 0.0
        %958 = vadd.xlane.f32.xlu0 %v957
        %v959 = vpop.xlane.xlu0 %958
        %v960 = vsel %vm654, %v832, 0.0
        %961 = vadd.xlane.f32.xlu0 %v960
        %v962 = vpop.xlane.xlu0 %961
        %v963 = vsel %vm654, %v833, 0.0
        %964 = vadd.xlane.f32.xlu0 %v963
        %v965 = vpop.xlane.xlu0 %964
        %v966 = vsel %vm654, %v834, 0.0
        %967 = vadd.xlane.f32.xlu0 %v966
        %v968 = vpop.xlane.xlu0 %967
        %v969 = vsel %vm654, %v835, 0.0
        %970 = vadd.xlane.f32.xlu0 %v969
        %v971 = vpop.xlane.xlu0 %970
        %v972 = vsel %vm654, %v836, 0.0
        %973 = vadd.xlane.f32.xlu0 %v972
        %v974 = vpop.xlane.xlu0 %973
        %v975 = vsel %vm654, %v837, 0.0
        %976 = vadd.xlane.f32.xlu0 %v975
        %v977 = vpop.xlane.xlu0 %976
        %v978 = vsel %vm654, %v838, 0.0
        %979 = vadd.xlane.f32.xlu0 %v978
        %v980 = vpop.xlane.xlu0 %979
        %v981 = vsel %vm654, %v839, 0.0
        %982 = vadd.xlane.f32.xlu0 %v981
        %v983 = vpop.xlane.xlu0 %982
        %v984 = vsel %vm654, %v840, 0.0
        %985 = vadd.xlane.f32.xlu0 %v984
        %v986 = vpop.xlane.xlu0 %985
        %v987 = vsel %vm654, %v841, 0.0
        %988 = vadd.xlane.f32.xlu0 %v987
        %v989 = vpop.xlane.xlu0 %988
        %v990 = vsel %vm654, %v938, 0.0
        %v991 = vsel %vm654, %v939, 0.0
        %v992 = vadd.f32 %v990, %v991
        %v993 = vsel %vm654, %v940, 0.0
        %v994 = vadd.f32 %v992, %v993
        %v995 = vsel %vm654, %v941, 0.0
        %v996 = vadd.f32 %v994, %v995
        %997 = vadd.xlane.f32.xlu0 %v996
        %v998 = vpop.xlane.xlu0 %997
        %v999 = vrot.slane %v998, 4
        %v1000 = vadd.f32 %v998, %v999
        %v1001 = vrot.slane %v1000, 2
        %v1002 = vadd.f32 %v1000, %v1001
        %v1003 = vrot.slane %v1002, 1
        %v1004 = vadd.f32 %v1002, %v1003
        %s1005 = vtos %v1004
        %vm1006 = vcmp.eq.s32.totalorder %v693, 0
        %v1023 = vlaneseq
        %v1024 = vand.u32 %v1023, 127
        %v1025 = vlaneseq
        %v1026 = vshrl.u32 %v1025, 7
        %v1027 = vsub.s32 %v1024, %v1026
        %v1028 = vrot.slane %v944, %v1027
        %v1029 = vadd.s32 %v1024, 4294967288
        %v1030 = vlaneseq
        %v1031 = vshrl.u32 %v1030, 7
        %v1032 = vsub.s32 %v1029, %v1031
        %v1033 = vrot.slane %v947, %v1032
        %vm1034 = vcmask 130112
        %v1035 = vsel %vm1034, %v1033, %v1028
        %v1036 = vadd.s32 %v1024, 4294967280
        %v1037 = vlaneseq
        %v1038 = vshrl.u32 %v1037, 7
        %v1039 = vsub.s32 %v1036, %v1038
        %v1040 = vrot.slane %v950, %v1039
        %vm1041 = vcmask 195712
        %v1042 = vsel %vm1041, %v1040, %v1035
        %v1043 = vadd.s32 %v1024, 4294967272
        %v1044 = vlaneseq
        %v1045 = vshrl.u32 %v1044, 7
        %v1046 = vsub.s32 %v1043, %v1045
        %v1047 = vrot.slane %v953, %v1046
        %vm1048 = vcmask 261312
        %v1049 = vsel %vm1048, %v1047, %v1042
        %v1050 = vadd.s32 %v1024, 4294967264
        %v1051 = vlaneseq
        %v1052 = vshrl.u32 %v1051, 7
        %v1053 = vsub.s32 %v1050, %v1052
        %v1054 = vrot.slane %v956, %v1053
        %vm1055 = vcmask 326912
        %v1056 = vsel %vm1055, %v1054, %v1049
        %v1057 = vadd.s32 %v1024, 4294967256
        %v1058 = vlaneseq
        %v1059 = vshrl.u32 %v1058, 7
        %v1060 = vsub.s32 %v1057, %v1059
        %v1061 = vrot.slane %v959, %v1060
        %vm1062 = vcmask 392512
        %v1063 = vsel %vm1062, %v1061, %v1056
        %v1064 = vadd.s32 %v1024, 4294967248
        %v1065 = vlaneseq
        %v1066 = vshrl.u32 %v1065, 7
        %v1067 = vsub.s32 %v1064, %v1066
        %v1068 = vrot.slane %v962, %v1067
        %vm1069 = vcmask 458112
        %v1070 = vsel %vm1069, %v1068, %v1063
        %v1071 = vadd.s32 %v1024, 4294967240
        %v1072 = vlaneseq
        %v1073 = vshrl.u32 %v1072, 7
        %v1074 = vsub.s32 %v1071, %v1073
        %v1075 = vrot.slane %v965, %v1074
        %vm1076 = vcmask 523712
        %v1077 = vsel %vm1076, %v1075, %v1070
        %v1078 = vadd.s32 %v1024, 4294967232
        %v1079 = vlaneseq
        %v1080 = vshrl.u32 %v1079, 7
        %v1081 = vsub.s32 %v1078, %v1080
        %v1082 = vrot.slane %v968, %v1081
        %vm1083 = vcmask 589312
        %v1084 = vsel %vm1083, %v1082, %v1077
        %v1085 = vadd.s32 %v1024, 4294967224
        %v1086 = vlaneseq
        %v1087 = vshrl.u32 %v1086, 7
        %v1088 = vsub.s32 %v1085, %v1087
        %v1089 = vrot.slane %v971, %v1088
        %vm1090 = vcmask 654912
        %v1091 = vsel %vm1090, %v1089, %v1084
        %v1092 = vadd.s32 %v1024, 4294967216
        %v1093 = vlaneseq
        %v1094 = vshrl.u32 %v1093, 7
        %v1095 = vsub.s32 %v1092, %v1094
        %v1096 = vrot.slane %v974, %v1095
        %vm1097 = vcmask 720512
        %v1098 = vsel %vm1097, %v1096, %v1091
        %v1099 = vadd.s32 %v1024, 4294967208
        %v1100 = vlaneseq
        %v1101 = vshrl.u32 %v1100, 7
        %v1102 = vsub.s32 %v1099, %v1101
        %v1103 = vrot.slane %v977, %v1102
        %vm1104 = vcmask 786112
        %v1105 = vsel %vm1104, %v1103, %v1098
        %v1106 = vadd.s32 %v1024, 4294967200
        %v1107 = vlaneseq
        %v1108 = vshrl.u32 %v1107, 7
        %v1109 = vsub.s32 %v1106, %v1108
        %v1110 = vrot.slane %v980, %v1109
        %vm1111 = vcmask 851712
        %v1112 = vsel %vm1111, %v1110, %v1105
        %v1113 = vadd.s32 %v1024, 4294967192
        %v1114 = vlaneseq
        %v1115 = vshrl.u32 %v1114, 7
        %v1116 = vsub.s32 %v1113, %v1115
        %v1117 = vrot.slane %v983, %v1116
        %vm1118 = vcmask 917312
        %v1119 = vsel %vm1118, %v1117, %v1112
        %v1120 = vadd.s32 %v1024, 4294967184
        %v1121 = vlaneseq
        %v1122 = vshrl.u32 %v1121, 7
        %v1123 = vsub.s32 %v1120, %v1122
        %v1124 = vrot.slane %v986, %v1123
        %vm1125 = vcmask 982912
        %v1126 = vsel %vm1125, %v1124, %v1119
        %v1127 = vadd.s32 %v1024, 4294967176
        %v1128 = vlaneseq
        %v1129 = vshrl.u32 %v1128, 7
        %v1130 = vsub.s32 %v1127, %v1129
        %v1131 = vrot.slane %v989, %v1130
        %vm1132 = vcmask 1048512
        %v1133 = vsel %vm1132, %v1131, %v1126
        %vm1134 = vcmask 1042434
        %v1135 = vsel %vm1134, %v1133, %v1133
        %vm1136 = vcmask 1043459
        %v1137 = vsel %vm1136, %v1133, %v1135
        %vm1138 = vcmask 1044484
        %v1139 = vsel %vm1138, %v1133, %v1137
        %vm1140 = vcmask 1045509
        %v1141 = vsel %vm1140, %v1133, %v1139
        %vm1142 = vcmask 1046534
        %v1143 = vsel %vm1142, %v1133, %v1141
        %vm1144 = vcmask 1047559
        %v1145 = vsel %vm1144, %v1133, %v1143
        %v1147 = vsel %vm1006, %v1145, 0.0
        %vm1148 = vcmp.eq.s32.totalorder %v693, 1
        %v1149 = vstv %s1005
        %v1150 = vsel %vm1148, %v1149, %v1147
        %1151 = vst [vmem:[%s290] sm:$0xff] %v1150
        %p1152 = scmp.lt.s32.totalorder %s28, 1
        %s1153 = scalar_select %p1152, %s28, 1
        %p1154 = scmp.lt.s32.totalorder %s29, 0
        %s1155 = scalar_select %p1154, %s29, 0
        %s1156 = smul.addr %s1153, 4
        %s1157 = sadd.s32 %s1155, %s1156
        %s1158 = smul.addr %s1157, 8
        %s1159 = scalar_lea.vmem %s4, %s1158
        %s1160 = sand.u32 %s165, 1
        %s1161 = scalar_lea.sflag [#allocation3], %s1160
        %s1162 = sand.u32 %s165, 1
        %s1163 = scalar_lea.vmem [#allocation2], %s1162
        %s1164 = sand.u32 %s193, 1
        %s1165 = scalar_lea.sflag [#allocation5], %s1164
        %s1166 = sand.u32 %s193, 1
        %s1167 = smul.addr %s1166, 8
        %s1168 = scalar_lea.vmem [#allocation4], %s1167
        // Predicated region
        $region37: #{tpu_custom_call.1} parent=35 // pred_check
          %p1169 = pneg %p147
        $region38: #{tpu_custom_call.1} parent=35 // pred_check_branch
          %1171 = sbr.rel (%p1169) target = $region40
        $region39: #{tpu_custom_call.1} parent=35 // pred_region
          _
        $region40: #{tpu_custom_call.1} parent=35 // pred_fallthru
          _
        // Predicated region
        $region41: #{tpu_custom_call.1} parent=35 // pred_check
          %p1172 = pneg %p175
        $region42: #{tpu_custom_call.1} parent=35 // pred_check_branch
          %1174 = sbr.rel (%p1172) target = $region44
        $region43: #{tpu_custom_call.1} parent=35 // pred_region
          %s1176 = ssub.s32 16, 16
          %1177 = vsyncadd %s1161, %s1176
          %s1178 = sadd.s32 %s29, %s28
          %s1179 = smul.addr %s1178, 16
          %s1180 = scalar_lea.hbm %s5, %s1179
          %s1182 = sshll.u32 %s1163, 4
          %s1183 = int_to_ptr.vmem [resolvable:$true] %s1182
          %1185 = dma.vmem_to_hbm [thread:$0]  %s1183, 16, %s1180, %s1161
        $region44: #{tpu_custom_call.1} parent=35 // pred_fallthru
          _
        // Predicated region
        $region45: #{tpu_custom_call.1} parent=35 // pred_check
          %p1186 = pneg %p203
        $region46: #{tpu_custom_call.1} parent=35 // pred_check_branch
          %1188 = sbr.rel (%p1186) target = $region48
        $region47: #{tpu_custom_call.1} parent=35 // pred_region
          %s1189 = sadd.s32 %s28, %s29
          %s1191 = ssub.s32 128, 128
          %1192 = vsyncadd %s1165, %s1191
          %s1193 = smul.addr %s1189, 128
          %s1194 = scalar_lea.hbm %s6, %s1193
          %s1196 = sshll.u32 %s1168, 4
          %s1197 = int_to_ptr.vmem [resolvable:$true] %s1196
          %1199 = dma.vmem_to_hbm [thread:$0]  %s1197, 128, %s1194, %s1165
        $region48: #{tpu_custom_call.1} parent=35 // pred_fallthru
          _
      $region36: #{tpu_custom_call.1} parent=5 // pred_fallthru
        _
      %p1200 = scmp.le.s32.totalorder 2, %s19
      // Predicated region
      $region49: #{tpu_custom_call.1} parent=5 // pred_check
        %p1201 = pneg %p1200
      $region50: #{tpu_custom_call.1} parent=5 // pred_check_branch
        %1203 = sbr.rel (%p1201) target = $region52
      $region51: #{tpu_custom_call.1} parent=5 // pred_region
        %s1204 = ssub.s32 %s19, 2
        // Predicated region
        $region53: #{tpu_custom_call.1} parent=51 // pred_check
          %p1205 = pneg %p153
        $region54: #{tpu_custom_call.1} parent=51 // pred_check_branch
          %1207 = sbr.rel (%p1205) target = $region56
        $region55: #{tpu_custom_call.1} parent=51 // pred_region
          %p1208 = scmp.lt.s32.totalorder %s30, 1
          %s1209 = scalar_select %p1208, %s30, 1
          %p1210 = scmp.lt.s32.totalorder %s31, 0
          %s1211 = scalar_select %p1210, %s31, 0
          %s1212 = smul.addr %s1209, 4
          %s1213 = sadd.s32 %s1211, %s1212
          %s1214 = smul.addr %s1213, 8
          %s1215 = scalar_lea.vmem %s4, %s1214
        $region56: #{tpu_custom_call.1} parent=51 // pred_fallthru
          _
        // Predicated region
        $region57: #{tpu_custom_call.1} parent=51 // pred_check
          %p1216 = pneg %p181
        $region58: #{tpu_custom_call.1} parent=51 // pred_check_branch
          %1218 = sbr.rel (%p1216) target = $region60
        $region59: #{tpu_custom_call.1} parent=51 // pred_region
          %s1219 = sand.u32 %s166, 1
          %s1220 = scalar_lea.sflag [#allocation3], %s1219
          %s1221 = sand.u32 %s166, 1
          %s1222 = scalar_lea.vmem [#allocation2], %s1221
          %1223 = dma.done %s1220, 16
        $region60: #{tpu_custom_call.1} parent=51 // pred_fallthru
          _
        // Predicated region
        $region61: #{tpu_custom_call.1} parent=51 // pred_check
          %p1224 = pneg %p209
        $region62: #{tpu_custom_call.1} parent=51 // pred_check_branch
          %1226 = sbr.rel (%p1224) target = $region64
        $region63: #{tpu_custom_call.1} parent=51 // pred_region
          %s1227 = sand.u32 %s194, 1
          %s1228 = scalar_lea.sflag [#allocation5], %s1227
          %s1229 = sand.u32 %s194, 1
          %s1230 = smul.addr %s1229, 8
          %s1231 = scalar_lea.vmem [#allocation4], %s1230
          %1232 = dma.done %s1228, 128
        $region64: #{tpu_custom_call.1} parent=51 // pred_fallthru
          _
      $region52: #{tpu_custom_call.1} parent=5 // pred_fallthru
        _
    $region6: #{tpu_custom_call.1} parent=1 // loop_footer
      %s23 = sadd.s32 1, %s19
    $region7: #{tpu_custom_call.1} parent=1 // loop_footer_branch
      %18 = sbr.rel target = $region3
    $region8: #{tpu_custom_call.1} parent=1 // loop_exit
      _
    %1233 = vsyncpa [#allocation3], 1
    %s1234 = scalar_lea.sflag [#allocation3], 1
    %1235 = vsyncpa %s1234, 1
    %1236 = vsyncpa [#allocation5], 1
    %s1237 = scalar_lea.sflag [#allocation5], 1
    %1238 = vsyncpa %s1237, 1

</llo_original>
